<compile_context>
chip_gen: v5e
topology: v5e:2x2
jax: 0.10.0
libtpu: 0.0.40
codegen_flags: <defaults>
</compile_context>

<pallas_src>
import functools

import jax
import jax.numpy as jnp
from jax import lax
from jax.experimental import pallas as pl
from jax.experimental.pallas import tpu as pltpu

_LANE = 128
_SUBLANE = 8


def _round_up(n, m):
    return ((n + m - 1) // m) * m


def _sigmoid_tanh(x):
    # sigmoid(x) == 0.5 * (tanh(x/2) + 1): one EUP transcendental per element.
    return 0.5 * (jnp.tanh(0.5 * x) + 1.0)


def _mog_lstm_kernel(gx_ref, whh_ref, wout_ref, bout_ref, out_ref,
                     h_sc, c_sc, *, seq_len, inner_unroll):
    """One grid step: run `t_chunk` LSTM steps for one batch shard.

    gx_ref  : (t_chunk, Bs, 4*Hp)  pre-projected gates (x @ W_ih^T + b), chunk
    whh_ref : (Hp, 4*Hp)           W_hh^T, gate-major columns (matmul dtype)
    wout_ref: (1, Hp)              output Linear weight row (f32, padded)
    bout_ref: (1, 1)               output Linear bias
    out_ref : (Bs, 128)            lane-dense output slab (written on last chunk)
    h_sc,c_sc: (Bs, Hp) f32        persistent recurrent state across grid steps
    """
    t_chunk, Bs, Hp4 = gx_ref.shape
    Hp = Hp4 // 4
    chunk_id = pl.program_id(1)
    n_chunks = pl.num_programs(1)

    @pl.when(chunk_id == 0)
    def _():
        h_sc[...] = jnp.zeros_like(h_sc)
        c_sc[...] = jnp.zeros_like(c_sc)

    whh = whh_ref[...]  # resident; already in matmul dtype (no in-kernel copy)

    def step(i, carry):
        h, c = carry
        # Only h @ W_hh^T sits on the sequential critical path (one MXU pass).
        gates = gx_ref[i].astype(jnp.float32) + jnp.dot(
            h.astype(whh.dtype), whh, preferred_element_type=jnp.float32)
        # Lane-aligned gate slices (Hp % 128 == 0).
        i_g = _sigmoid_tanh(gates[:, 0 * Hp:1 * Hp])
        f_g = _sigmoid_tanh(gates[:, 1 * Hp:2 * Hp])
        g_g = jnp.tanh(gates[:, 2 * Hp:3 * Hp])
        o_g = _sigmoid_tanh(gates[:, 3 * Hp:4 * Hp])
        c_new = f_g * c + i_g * g_g
        h_new = o_g * jnp.tanh(c_new)
        # Mask padded tail timesteps (when T % t_chunk != 0).
        valid = (chunk_id * t_chunk + i) < seq_len
        h = jnp.where(valid, h_new, h)
        c = jnp.where(valid, c_new, c)
        return h, c

    h, c = lax.fori_loop(0, t_chunk, step, (h_sc[...], c_sc[...]),
                         unroll=inner_unroll)
    h_sc[...] = h
    c_sc[...] = c

    @pl.when(chunk_id == n_chunks - 1)
    def _():
        # Linear(H, 1) as VPU multiply + lane reduction (no wasted N=1 MXU pass).
        y = jnp.sum(h * wout_ref[...], axis=-1, keepdims=True) + bout_ref[...]
        out_ref[...] = jnp.broadcast_to(y, out_ref.shape)  # lane-dense store


def mogrifier_lstm_forward(x, params, *, matmul_dtype=jnp.bfloat16,
                           t_chunk=32, batch_splits=1, inner_unroll=8):
    """x: (B, T, D) float32.  Returns (B, 1) float32.

    matmul_dtype : MXU operand dtype (bf16 default on all TPU gens; f32 matches
                   PyTorch numerics exactly).
    t_chunk      : sequence chunk length streamed per grid step.
    batch_splits : leading "parallel" grid axis over batch shards; set 2 on
                   v7x to use both TensorCores (no effect on v5e/v6e).
    """
    B, T, D = x.shape
    H = params["w_hh"].shape[1]
    f32 = jnp.float32
    mdt = jnp.dtype(matmul_dtype)

    Hp = _round_up(H, _LANE)                           # per-gate width, lane multiple
    Bs = _round_up(pl.cdiv(B, batch_splits), _SUBLANE)  # rows per batch shard
    Bp = Bs * batch_splits
    t_chunk = max(1, min(t_chunk, T))
    Tp = _round_up(T, t_chunk)
    n_chunks = Tp // t_chunk

    # --- Re-layout weights: gate-major columns, each gate padded H -> Hp ---
    w_ih = params["w_ih"].astype(f32).reshape(4, H, D)
    w_hh = params["w_hh"].astype(f32).reshape(4, H, H)
    b = (params["b_ih"] + params["b_hh"]).astype(f32).reshape(4, H)

    w_ih_p = jnp.zeros((4, Hp, D), f32).at[:, :H, :].set(w_ih)
    w_hh_p = jnp.zeros((4, Hp, Hp), f32).at[:, :H, :H].set(w_hh)
    b_p = jnp.zeros((4, Hp), f32).at[:, :H].set(b)

    wih_t = jnp.transpose(w_ih_p, (2, 0, 1)).reshape(D, 4 * Hp)            # (D, 4Hp)
    whh_t = jnp.transpose(w_hh_p, (2, 0, 1)).reshape(Hp, 4 * Hp).astype(mdt)
    bias = b_p.reshape(1, 1, 4 * Hp)

    wout = jnp.zeros((1, Hp), f32).at[:, :H].set(params["w_out"].astype(f32))
    bout = params["b_out"].astype(f32).reshape(1, 1)

    # --- Hoisted input projection in the wrapper (no recurrent dependency).
    # Keeps the lane-padded (D=4 -> 128) raw x out of VMEM entirely; the kernel
    # only streams lane-dense gx chunks, whose DMAs the pipeline overlaps with
    # the latency-bound recurrence.
    prec = (jax.lax.Precision.HIGHEST if mdt == jnp.dtype(jnp.float32)
            else jax.lax.Precision.DEFAULT)
    gx_real = jnp.einsum('btd,dg->tbg', x.astype(f32), wih_t,
                         precision=prec) + bias                             # (T, B, 4Hp)
    gx = jnp.zeros((Tp, Bp, 4 * Hp), mdt).at[:T, :B, :].set(
        gx_real.astype(mdt))

    # --- VMEM budget estimate (explicit limit, headroom below physical) ---
    it = mdt.itemsize
    vmem_bytes = (2 * t_chunk * Bs * 4 * Hp * it       # gx chunk, double-buffered
                  + 2 * Hp * 4 * Hp * it               # W_hh (conservatively 2 bufs)
                  + 2 * Bs * Hp * 4 * 2                # h/c scratch (f32)
                  + 2 * Bs * _LANE * 4                 # output block
                  + (8 << 20))                         # temporaries / slack
    vmem_limit = int(min(max(vmem_bytes, 32 << 20), 100 << 20))

    kernel = functools.partial(_mog_lstm_kernel, seq_len=T,
                               inner_unroll=max(1, min(inner_unroll, t_chunk)))

    out = pl.pallas_call(
        kernel,
        out_shape=jax.ShapeDtypeStruct((Bp, _LANE), f32),
        grid_spec=pltpu.PrefetchScalarGridSpec(
            num_scalar_prefetch=0,
            grid=(batch_splits, n_chunks),
            in_specs=[
                pl.BlockSpec((t_chunk, Bs, 4 * Hp), lambda s, t: (t, s, 0)),  # gx chunk
                pl.BlockSpec((Hp, 4 * Hp), lambda s, t: (0, 0)),              # W_hh^T
                pl.BlockSpec((1, Hp), lambda s, t: (0, 0)),                   # W_out row
                pl.BlockSpec((1, 1), lambda s, t: (0, 0)),                    # b_out
            ],
            out_specs=pl.BlockSpec((Bs, _LANE), lambda s, t: (s, 0)),
            scratch_shapes=[
                pltpu.VMEM((Bs, Hp), jnp.float32),   # h state (persists across chunks)
                pltpu.VMEM((Bs, Hp), jnp.float32),   # c state
            ],
        ),
        compiler_params=pltpu.CompilerParams(
            dimension_semantics=("parallel", "arbitrary"),
            vmem_limit_bytes=vmem_limit,
        ),
    )(gx, whh_t, wout, bout)

    return out[:B, 0:1]


def _reference_forward(x, params):
    """Pure-JAX reference (PyTorch LSTM semantics) for validation."""
    B, T, D = x.shape
    H = params["w_hh"].shape[1]
    h = jnp.zeros((B, H), jnp.float32)
    c = jnp.zeros((B, H), jnp.float32)
    wih_t = params["w_ih"].T
    whh_t = params["w_hh"].T
    b = params["b_ih"] + params["b_hh"]
    hi = jax.lax.Precision.HIGHEST
    for t in range(T):
        g = (jnp.dot(x[:, t, :], wih_t, precision=hi)
             + jnp.dot(h, whh_t, precision=hi) + b)
        i = jax.nn.sigmoid(g[:, 0 * H:1 * H])
        f = jax.nn.sigmoid(g[:, 1 * H:2 * H])
        gg = jnp.tanh(g[:, 2 * H:3 * H])
        o = jax.nn.sigmoid(g[:, 3 * H:4 * H])
        c = f * c + i * gg
        h = o * jnp.tanh(c)
    return jnp.dot(h, params["w_out"].T, precision=hi) + params["b_out"][None, :]


def init_params(key, input_dim, hidden_dim):
    """Deterministic synthetic parameters (shapes match the PyTorch module)."""
    ks = jax.random.split(key, 10)
    k = 1.0 / jnp.sqrt(hidden_dim)
    u = lambda kk, shape: jax.random.uniform(kk, shape, jnp.float32, -k, k)
    return {
        # nn.LSTM(input_dim, hidden_dim, 1): weight_ih_l0, weight_hh_l0, biases
        "w_ih": u(ks[0], (4 * hidden_dim, input_dim)),
        "w_hh": u(ks[1], (4 * hidden_dim, hidden_dim)),
        "b_ih": u(ks[2], (4 * hidden_dim,)),
        "b_hh": u(ks[3], (4 * hidden_dim,)),
        # nn.Linear(hidden_dim, 1)
        "w_out": u(ks[4], (1, hidden_dim)),
        "b_out": u(ks[5], (1,)),
        # Mogrifier transforms (created in __init__, UNUSED by forward)
        "w_xt": u(ks[6], (hidden_dim, input_dim)),   # x_transform weight
        "b_xt": u(ks[7], (hidden_dim,)),
        "w_ht": u(ks[8], (input_dim, hidden_dim)),   # h_transform weight
        "b_ht": u(ks[9], (input_dim,)),
    }


if __name__ == "__main__":
    B, T, D, H = 2, 8, 4, 32
    key = jax.random.PRNGKey(0)
    kx, kp = jax.random.split(key)
    x = jax.random.normal(kx, (B, T, D), jnp.float32)
    params = init_params(kp, D, H)
    ref = _reference_forward(x, params)

    # Exact-numerics path: f32 matmul operands, even T chunking, single shard.
    out_f32 = jax.block_until_ready(
        mogrifier_lstm_forward(x, params, matmul_dtype=jnp.float32,
                               t_chunk=4, batch_splits=1))
    assert out_f32.shape == (B, 1)
    assert jnp.allclose(out_f32, ref, atol=1e-4, rtol=1e-4), (out_f32, ref)

    # Default fast path: bf16 MXU operands, 2-way batch split (both v7x cores),
    # chunk size that does NOT divide T (exercises tail masking).
    out_bf16 = jax.block_until_ready(
        mogrifier_lstm_forward(x, params, t_chunk=3, batch_splits=2))
    assert out_bf16.shape == (B, 1)
    assert jnp.allclose(out_bf16, ref, atol=5e-2, rtol=5e-2), (out_bf16, ref)

    print("KERNEL_OK")
</pallas_src>

<mosaic_0001>
module attributes {stable_mosaic.version = 11 : i64} {
  func.func @_mog_lstm_kernel(%arg0: i32, %arg1: i32, %arg2: memref<4x8x512xf32, #tpu.memory_space<vmem>>, %arg3: memref<128x512xf32, #tpu.memory_space<vmem>>, %arg4: memref<1x128xf32, #tpu.memory_space<vmem>>, %arg5: memref<1x1xf32, #tpu.memory_space<vmem>>, %arg6: memref<8x128xf32, #tpu.memory_space<vmem>>, %arg7: memref<8x128xf32, #tpu.memory_space<vmem>>, %arg8: memref<8x128xf32, #tpu.memory_space<vmem>>) attributes {dimension_semantics = [#tpu.dimension_semantics<parallel>, #tpu.dimension_semantics<arbitrary>], iteration_bounds = array<i64: 1, 2>, scalar_prefetch = 0 : i64, scratch_operands = 2 : i64, tpu.core_type = #tpu.core_type<tc>, window_params = [{transform_indices = @transform_0, window_bounds = array<i64: 4, 8, 512>}, {pipeline_mode = #tpu.pipeline_mode<synchronous>, transform_indices = @transform_1, window_bounds = array<i64: 128, 512>}, {pipeline_mode = #tpu.pipeline_mode<synchronous>, transform_indices = @transform_2, window_bounds = array<i64: 1, 128>}, {pipeline_mode = #tpu.pipeline_mode<synchronous>, transform_indices = @transform_3, window_bounds = array<i64: 1, 1>}, {transform_indices = @transform_4, window_bounds = array<i64: 8, 128>}]} {
    %c0_i32 = arith.constant 0 : i32
    %0 = arith.cmpi eq, %arg1, %c0_i32 : i32
    %1 = arith.extui %0 : i1 to i32
    %c0_i32_0 = arith.constant 0 : i32
    %2 = arith.cmpi ne, %1, %c0_i32_0 : i32
    scf.if %2 {
      %cst_67 = arith.constant 0.000000e+00 : f32
      %175 = vector.broadcast %cst_67 : f32 to vector<8x128xf32>
      %c0_68 = arith.constant 0 : index
      %c0_69 = arith.constant 0 : index
      %176 = vector.load %arg7[%c0_68, %c0_69] : memref<8x128xf32, #tpu.memory_space<vmem>>, vector<8x128xf32>
      tpu.vector_store %arg7[%c0_68, %c0_69], %175 {strides = array<i32>} : memref<8x128xf32, #tpu.memory_space<vmem>>, vector<8x128xf32>,
      %cst_70 = arith.constant 0.000000e+00 : f32
      %177 = vector.broadcast %cst_70 : f32 to vector<8x128xf32>
      %c0_71 = arith.constant 0 : index
      %c0_72 = arith.constant 0 : index
      %178 = vector.load %arg8[%c0_71, %c0_72] : memref<8x128xf32, #tpu.memory_space<vmem>>, vector<8x128xf32>
      tpu.vector_store %arg8[%c0_71, %c0_72], %177 {strides = array<i32>} : memref<8x128xf32, #tpu.memory_space<vmem>>, vector<8x128xf32>,
    } else {
    }
    %c0 = arith.constant 0 : index
    %c0_1 = arith.constant 0 : index
    %3 = vector.load %arg3[%c0, %c0_1] : memref<128x512xf32, #tpu.memory_space<vmem>>, vector<128x512xf32>
    %c0_2 = arith.constant 0 : index
    %c0_3 = arith.constant 0 : index
    %4 = vector.load %arg7[%c0_2, %c0_3] : memref<8x128xf32, #tpu.memory_space<vmem>>, vector<8x128xf32>
    %c0_4 = arith.constant 0 : index
    %c0_5 = arith.constant 0 : index
    %5 = vector.load %arg8[%c0_4, %c0_5] : memref<8x128xf32, #tpu.memory_space<vmem>>, vector<8x128xf32>
    %c0_i32_6 = arith.constant 0 : i32
    %6 = arith.index_cast %c0_i32_6 : i32 to index
    %c0_7 = arith.constant 0 : index
    %c0_8 = arith.constant 0 : index
    %7 = vector.load %arg2[%6, %c0_7, %c0_8] : memref<4x8x512xf32, #tpu.memory_space<vmem>>, vector<1x8x512xf32>
    %8 = vector.shape_cast %7 : vector<1x8x512xf32> to vector<8x512xf32>
    %cst = arith.constant dense<0.000000e+00> : vector<8x512xf32>
    %9 = tpu.matmul %4, %3, %cst {dimension_numbers = #tpu.dot_dimension_numbers<[1], [0], [0], [1], [0, 0, 1, 1], [], []>} : vector<8x128xf32>, vector<128x512xf32>, vector<8x512xf32> -> vector<8x512xf32>
    %10 = arith.addf %8, %9 : vector<8x512xf32>
    %11 = vector.extract_strided_slice %10 {offsets = [0, 0], sizes = [8, 128], strides = [1, 1]} : vector<8x512xf32> to vector<8x128xf32>
    %cst_9 = arith.constant 5.000000e-01 : f32
    %12 = vector.broadcast %cst_9 : f32 to vector<8x128xf32>
    %13 = arith.mulf %12, %11 : vector<8x128xf32>
    %14 = math.tanh %13 : vector<8x128xf32>
    %cst_10 = arith.constant 1.000000e+00 : f32
    %15 = vector.broadcast %cst_10 : f32 to vector<8x128xf32>
    %16 = arith.addf %14, %15 : vector<8x128xf32>
    %cst_11 = arith.constant 5.000000e-01 : f32
    %17 = vector.broadcast %cst_11 : f32 to vector<8x128xf32>
    %18 = arith.mulf %17, %16 : vector<8x128xf32>
    %19 = vector.extract_strided_slice %10 {offsets = [0, 128], sizes = [8, 128], strides = [1, 1]} : vector<8x512xf32> to vector<8x128xf32>
    %cst_12 = arith.constant 5.000000e-01 : f32
    %20 = vector.broadcast %cst_12 : f32 to vector<8x128xf32>
    %21 = arith.mulf %20, %19 : vector<8x128xf32>
    %22 = math.tanh %21 : vector<8x128xf32>
    %cst_13 = arith.constant 1.000000e+00 : f32
    %23 = vector.broadcast %cst_13 : f32 to vector<8x128xf32>
    %24 = arith.addf %22, %23 : vector<8x128xf32>
    %cst_14 = arith.constant 5.000000e-01 : f32
    %25 = vector.broadcast %cst_14 : f32 to vector<8x128xf32>
    %26 = arith.mulf %25, %24 : vector<8x128xf32>
    %27 = vector.extract_strided_slice %10 {offsets = [0, 256], sizes = [8, 128], strides = [1, 1]} : vector<8x512xf32> to vector<8x128xf32>
    %28 = math.tanh %27 : vector<8x128xf32>
    %29 = vector.extract_strided_slice %10 {offsets = [0, 384], sizes = [8, 128], strides = [1, 1]} : vector<8x512xf32> to vector<8x128xf32>
    %cst_15 = arith.constant 5.000000e-01 : f32
    %30 = vector.broadcast %cst_15 : f32 to vector<8x128xf32>
    %31 = arith.mulf %30, %29 : vector<8x128xf32>
    %32 = math.tanh %31 : vector<8x128xf32>
    %cst_16 = arith.constant 1.000000e+00 : f32
    %33 = vector.broadcast %cst_16 : f32 to vector<8x128xf32>
    %34 = arith.addf %32, %33 : vector<8x128xf32>
    %cst_17 = arith.constant 5.000000e-01 : f32
    %35 = vector.broadcast %cst_17 : f32 to vector<8x128xf32>
    %36 = arith.mulf %35, %34 : vector<8x128xf32>
    %37 = arith.mulf %26, %5 : vector<8x128xf32>
    %38 = arith.mulf %18, %28 : vector<8x128xf32>
    %39 = arith.addf %37, %38 : vector<8x128xf32>
    %40 = math.tanh %39 : vector<8x128xf32>
    %41 = arith.mulf %36, %40 : vector<8x128xf32>
    %c4_i32 = arith.constant 4 : i32
    %42 = arith.muli %arg1, %c4_i32 : i32
    %43 = arith.addi %42, %c0_i32_6 : i32
    %c8_i32 = arith.constant 8 : i32
    %44 = arith.cmpi slt, %43, %c8_i32 : i32
    %45 = arith.select %44, %41, %4 : vector<8x128xf32>
    %46 = arith.select %44, %39, %5 : vector<8x128xf32>
    %c1_i32 = arith.constant 1 : i32
    %47 = arith.index_cast %c1_i32 : i32 to index
    %c0_18 = arith.constant 0 : index
    %c0_19 = arith.constant 0 : index
    %48 = vector.load %arg2[%47, %c0_18, %c0_19] : memref<4x8x512xf32, #tpu.memory_space<vmem>>, vector<1x8x512xf32>
    %49 = vector.shape_cast %48 : vector<1x8x512xf32> to vector<8x512xf32>
    %cst_20 = arith.constant dense<0.000000e+00> : vector<8x512xf32>
    %50 = tpu.matmul %45, %3, %cst_20 {dimension_numbers = #tpu.dot_dimension_numbers<[1], [0], [0], [1], [0, 0, 1, 1], [], []>} : vector<8x128xf32>, vector<128x512xf32>, vector<8x512xf32> -> vector<8x512xf32>
    %51 = arith.addf %49, %50 : vector<8x512xf32>
    %52 = vector.extract_strided_slice %51 {offsets = [0, 0], sizes = [8, 128], strides = [1, 1]} : vector<8x512xf32> to vector<8x128xf32>
    %cst_21 = arith.constant 5.000000e-01 : f32
    %53 = vector.broadcast %cst_21 : f32 to vector<8x128xf32>
    %54 = arith.mulf %53, %52 : vector<8x128xf32>
    %55 = math.tanh %54 : vector<8x128xf32>
    %cst_22 = arith.constant 1.000000e+00 : f32
    %56 = vector.broadcast %cst_22 : f32 to vector<8x128xf32>
    %57 = arith.addf %55, %56 : vector<8x128xf32>
    %cst_23 = arith.constant 5.000000e-01 : f32
    %58 = vector.broadcast %cst_23 : f32 to vector<8x128xf32>
    %59 = arith.mulf %58, %57 : vector<8x128xf32>
    %60 = vector.extract_strided_slice %51 {offsets = [0, 128], sizes = [8, 128], strides = [1, 1]} : vector<8x512xf32> to vector<8x128xf32>
    %cst_24 = arith.constant 5.000000e-01 : f32
    %61 = vector.broadcast %cst_24 : f32 to vector<8x128xf32>
    %62 = arith.mulf %61, %60 : vector<8x128xf32>
    %63 = math.tanh %62 : vector<8x128xf32>
    %cst_25 = arith.constant 1.000000e+00 : f32
    %64 = vector.broadcast %cst_25 : f32 to vector<8x128xf32>
    %65 = arith.addf %63, %64 : vector<8x128xf32>
    %cst_26 = arith.constant 5.000000e-01 : f32
    %66 = vector.broadcast %cst_26 : f32 to vector<8x128xf32>
    %67 = arith.mulf %66, %65 : vector<8x128xf32>
    %68 = vector.extract_strided_slice %51 {offsets = [0, 256], sizes = [8, 128], strides = [1, 1]} : vector<8x512xf32> to vector<8x128xf32>
    %69 = math.tanh %68 : vector<8x128xf32>
    %70 = vector.extract_strided_slice %51 {offsets = [0, 384], sizes = [8, 128], strides = [1, 1]} : vector<8x512xf32> to vector<8x128xf32>
    %cst_27 = arith.constant 5.000000e-01 : f32
    %71 = vector.broadcast %cst_27 : f32 to vector<8x128xf32>
    %72 = arith.mulf %71, %70 : vector<8x128xf32>
    %73 = math.tanh %72 : vector<8x128xf32>
    %cst_28 = arith.constant 1.000000e+00 : f32
    %74 = vector.broadcast %cst_28 : f32 to vector<8x128xf32>
    %75 = arith.addf %73, %74 : vector<8x128xf32>
    %cst_29 = arith.constant 5.000000e-01 : f32
    %76 = vector.broadcast %cst_29 : f32 to vector<8x128xf32>
    %77 = arith.mulf %76, %75 : vector<8x128xf32>
    %78 = arith.mulf %67, %46 : vector<8x128xf32>
    %79 = arith.mulf %59, %69 : vector<8x128xf32>
    %80 = arith.addf %78, %79 : vector<8x128xf32>
    %81 = math.tanh %80 : vector<8x128xf32>
    %82 = arith.mulf %77, %81 : vector<8x128xf32>
    %c4_i32_30 = arith.constant 4 : i32
    %83 = arith.muli %arg1, %c4_i32_30 : i32
    %84 = arith.addi %83, %c1_i32 : i32
    %c8_i32_31 = arith.constant 8 : i32
    %85 = arith.cmpi slt, %84, %c8_i32_31 : i32
    %86 = arith.select %85, %82, %45 : vector<8x128xf32>
    %87 = arith.select %85, %80, %46 : vector<8x128xf32>
    %c2_i32 = arith.constant 2 : i32
    %88 = arith.index_cast %c2_i32 : i32 to index
    %c0_32 = arith.constant 0 : index
    %c0_33 = arith.constant 0 : index
    %89 = vector.load %arg2[%88, %c0_32, %c0_33] : memref<4x8x512xf32, #tpu.memory_space<vmem>>, vector<1x8x512xf32>
    %90 = vector.shape_cast %89 : vector<1x8x512xf32> to vector<8x512xf32>
    %cst_34 = arith.constant dense<0.000000e+00> : vector<8x512xf32>
    %91 = tpu.matmul %86, %3, %cst_34 {dimension_numbers = #tpu.dot_dimension_numbers<[1], [0], [0], [1], [0, 0, 1, 1], [], []>} : vector<8x128xf32>, vector<128x512xf32>, vector<8x512xf32> -> vector<8x512xf32>
    %92 = arith.addf %90, %91 : vector<8x512xf32>
    %93 = vector.extract_strided_slice %92 {offsets = [0, 0], sizes = [8, 128], strides = [1, 1]} : vector<8x512xf32> to vector<8x128xf32>
    %cst_35 = arith.constant 5.000000e-01 : f32
    %94 = vector.broadcast %cst_35 : f32 to vector<8x128xf32>
    %95 = arith.mulf %94, %93 : vector<8x128xf32>
    %96 = math.tanh %95 : vector<8x128xf32>
    %cst_36 = arith.constant 1.000000e+00 : f32
    %97 = vector.broadcast %cst_36 : f32 to vector<8x128xf32>
    %98 = arith.addf %96, %97 : vector<8x128xf32>
    %cst_37 = arith.constant 5.000000e-01 : f32
    %99 = vector.broadcast %cst_37 : f32 to vector<8x128xf32>
    %100 = arith.mulf %99, %98 : vector<8x128xf32>
    %101 = vector.extract_strided_slice %92 {offsets = [0, 128], sizes = [8, 128], strides = [1, 1]} : vector<8x512xf32> to vector<8x128xf32>
    %cst_38 = arith.constant 5.000000e-01 : f32
    %102 = vector.broadcast %cst_38 : f32 to vector<8x128xf32>
    %103 = arith.mulf %102, %101 : vector<8x128xf32>
    %104 = math.tanh %103 : vector<8x128xf32>
    %cst_39 = arith.constant 1.000000e+00 : f32
    %105 = vector.broadcast %cst_39 : f32 to vector<8x128xf32>
    %106 = arith.addf %104, %105 : vector<8x128xf32>
    %cst_40 = arith.constant 5.000000e-01 : f32
    %107 = vector.broadcast %cst_40 : f32 to vector<8x128xf32>
    %108 = arith.mulf %107, %106 : vector<8x128xf32>
    %109 = vector.extract_strided_slice %92 {offsets = [0, 256], sizes = [8, 128], strides = [1, 1]} : vector<8x512xf32> to vector<8x128xf32>
    %110 = math.tanh %109 : vector<8x128xf32>
    %111 = vector.extract_strided_slice %92 {offsets = [0, 384], sizes = [8, 128], strides = [1, 1]} : vector<8x512xf32> to vector<8x128xf32>
    %cst_41 = arith.constant 5.000000e-01 : f32
    %112 = vector.broadcast %cst_41 : f32 to vector<8x128xf32>
    %113 = arith.mulf %112, %111 : vector<8x128xf32>
    %114 = math.tanh %113 : vector<8x128xf32>
    %cst_42 = arith.constant 1.000000e+00 : f32
    %115 = vector.broadcast %cst_42 : f32 to vector<8x128xf32>
    %116 = arith.addf %114, %115 : vector<8x128xf32>
    %cst_43 = arith.constant 5.000000e-01 : f32
    %117 = vector.broadcast %cst_43 : f32 to vector<8x128xf32>
    %118 = arith.mulf %117, %116 : vector<8x128xf32>
    %119 = arith.mulf %108, %87 : vector<8x128xf32>
    %120 = arith.mulf %100, %110 : vector<8x128xf32>
    %121 = arith.addf %119, %120 : vector<8x128xf32>
    %122 = math.tanh %121 : vector<8x128xf32>
    %123 = arith.mulf %118, %122 : vector<8x128xf32>
    %c4_i32_44 = arith.constant 4 : i32
    %124 = arith.muli %arg1, %c4_i32_44 : i32
    %125 = arith.addi %124, %c2_i32 : i32
    %c8_i32_45 = arith.constant 8 : i32
    %126 = arith.cmpi slt, %125, %c8_i32_45 : i32
    %127 = arith.select %126, %123, %86 : vector<8x128xf32>
    %128 = arith.select %126, %121, %87 : vector<8x128xf32>
    %c3_i32 = arith.constant 3 : i32
    %129 = arith.index_cast %c3_i32 : i32 to index
    %c0_46 = arith.constant 0 : index
    %c0_47 = arith.constant 0 : index
    %130 = vector.load %arg2[%129, %c0_46, %c0_47] : memref<4x8x512xf32, #tpu.memory_space<vmem>>, vector<1x8x512xf32>
    %131 = vector.shape_cast %130 : vector<1x8x512xf32> to vector<8x512xf32>
    %cst_48 = arith.constant dense<0.000000e+00> : vector<8x512xf32>
    %132 = tpu.matmul %127, %3, %cst_48 {dimension_numbers = #tpu.dot_dimension_numbers<[1], [0], [0], [1], [0, 0, 1, 1], [], []>} : vector<8x128xf32>, vector<128x512xf32>, vector<8x512xf32> -> vector<8x512xf32>
    %133 = arith.addf %131, %132 : vector<8x512xf32>
    %134 = vector.extract_strided_slice %133 {offsets = [0, 0], sizes = [8, 128], strides = [1, 1]} : vector<8x512xf32> to vector<8x128xf32>
    %cst_49 = arith.constant 5.000000e-01 : f32
    %135 = vector.broadcast %cst_49 : f32 to vector<8x128xf32>
    %136 = arith.mulf %135, %134 : vector<8x128xf32>
    %137 = math.tanh %136 : vector<8x128xf32>
    %cst_50 = arith.constant 1.000000e+00 : f32
    %138 = vector.broadcast %cst_50 : f32 to vector<8x128xf32>
    %139 = arith.addf %137, %138 : vector<8x128xf32>
    %cst_51 = arith.constant 5.000000e-01 : f32
    %140 = vector.broadcast %cst_51 : f32 to vector<8x128xf32>
    %141 = arith.mulf %140, %139 : vector<8x128xf32>
    %142 = vector.extract_strided_slice %133 {offsets = [0, 128], sizes = [8, 128], strides = [1, 1]} : vector<8x512xf32> to vector<8x128xf32>
    %cst_52 = arith.constant 5.000000e-01 : f32
    %143 = vector.broadcast %cst_52 : f32 to vector<8x128xf32>
    %144 = arith.mulf %143, %142 : vector<8x128xf32>
    %145 = math.tanh %144 : vector<8x128xf32>
    %cst_53 = arith.constant 1.000000e+00 : f32
    %146 = vector.broadcast %cst_53 : f32 to vector<8x128xf32>
    %147 = arith.addf %145, %146 : vector<8x128xf32>
    %cst_54 = arith.constant 5.000000e-01 : f32
    %148 = vector.broadcast %cst_54 : f32 to vector<8x128xf32>
    %149 = arith.mulf %148, %147 : vector<8x128xf32>
    %150 = vector.extract_strided_slice %133 {offsets = [0, 256], sizes = [8, 128], strides = [1, 1]} : vector<8x512xf32> to vector<8x128xf32>
    %151 = math.tanh %150 : vector<8x128xf32>
    %152 = vector.extract_strided_slice %133 {offsets = [0, 384], sizes = [8, 128], strides = [1, 1]} : vector<8x512xf32> to vector<8x128xf32>
    %cst_55 = arith.constant 5.000000e-01 : f32
    %153 = vector.broadcast %cst_55 : f32 to vector<8x128xf32>
    %154 = arith.mulf %153, %152 : vector<8x128xf32>
    %155 = math.tanh %154 : vector<8x128xf32>
    %cst_56 = arith.constant 1.000000e+00 : f32
    %156 = vector.broadcast %cst_56 : f32 to vector<8x128xf32>
    %157 = arith.addf %155, %156 : vector<8x128xf32>
    %cst_57 = arith.constant 5.000000e-01 : f32
    %158 = vector.broadcast %cst_57 : f32 to vector<8x128xf32>
    %159 = arith.mulf %158, %157 : vector<8x128xf32>
    %160 = arith.mulf %149, %128 : vector<8x128xf32>
    %161 = arith.mulf %141, %151 : vector<8x128xf32>
    %162 = arith.addf %160, %161 : vector<8x128xf32>
    %163 = math.tanh %162 : vector<8x128xf32>
    %164 = arith.mulf %159, %163 : vector<8x128xf32>
    %c4_i32_58 = arith.constant 4 : i32
    %165 = arith.muli %arg1, %c4_i32_58 : i32
    %166 = arith.addi %165, %c3_i32 : i32
    %c8_i32_59 = arith.constant 8 : i32
    %167 = arith.cmpi slt, %166, %c8_i32_59 : i32
    %168 = arith.select %167, %164, %127 : vector<8x128xf32>
    %169 = arith.select %167, %162, %128 : vector<8x128xf32>
    %c4_i32_60 = arith.constant 4 : i32
    %c0_61 = arith.constant 0 : index
    %c0_62 = arith.constant 0 : index
    %170 = vector.load %arg7[%c0_61, %c0_62] : memref<8x128xf32, #tpu.memory_space<vmem>>, vector<8x128xf32>
    tpu.vector_store %arg7[%c0_61, %c0_62], %168 {strides = array<i32>} : memref<8x128xf32, #tpu.memory_space<vmem>>, vector<8x128xf32>,
    %c0_63 = arith.constant 0 : index
    %c0_64 = arith.constant 0 : index
    %171 = vector.load %arg8[%c0_63, %c0_64] : memref<8x128xf32, #tpu.memory_space<vmem>>, vector<8x128xf32>
    tpu.vector_store %arg8[%c0_63, %c0_64], %169 {strides = array<i32>} : memref<8x128xf32, #tpu.memory_space<vmem>>, vector<8x128xf32>,
    %c1_i32_65 = arith.constant 1 : i32
    %172 = arith.cmpi eq, %arg1, %c1_i32_65 : i32
    %173 = arith.extui %172 : i1 to i32
    %c0_i32_66 = arith.constant 0 : i32
    %174 = arith.cmpi ne, %173, %c0_i32_66 : i32
    scf.if %174 {
      %c0_67 = arith.constant 0 : index
      %c0_68 = arith.constant 0 : index
      %175 = vector.load %arg4[%c0_67, %c0_68] : memref<1x128xf32, #tpu.memory_space<vmem>>, vector<1x128xf32>
      %176 = vector.broadcast %175 : vector<1x128xf32> to vector<8x128xf32>
      %177 = arith.mulf %168, %176 : vector<8x128xf32>
      %cst_69 = arith.constant dense<0.000000e+00> : vector<8xf32>
      %178 = vector.multi_reduction <add>, %177, %cst_69 [1] : vector<8x128xf32> to vector<8xf32>
      %179 = vector.shape_cast %178 : vector<8xf32> to vector<8x1xf32>
      %c0_70 = arith.constant 0 : index
      %c0_71 = arith.constant 0 : index
      %180 = vector.load %arg5[%c0_70, %c0_71] : memref<1x1xf32, #tpu.memory_space<vmem>>, vector<1x1xf32>
      %181 = vector.broadcast %180 : vector<1x1xf32> to vector<8x1xf32>
      %182 = arith.addf %179, %181 : vector<8x1xf32>
      %183 = vector.shape_cast %182 : vector<8x1xf32> to vector<8x1xf32>
      %184 = vector.broadcast %183 : vector<8x1xf32> to vector<8x128xf32>
      %c0_72 = arith.constant 0 : index
      %c0_73 = arith.constant 0 : index
      %185 = vector.load %arg6[%c0_72, %c0_73] : memref<8x128xf32, #tpu.memory_space<vmem>>, vector<8x128xf32>
      tpu.vector_store %arg6[%c0_72, %c0_73], %184 {strides = array<i32>} : memref<8x128xf32, #tpu.memory_space<vmem>>, vector<8x128xf32>,
    } else {
    }
    return
  }
  func.func @transform_0(%arg0: i32, %arg1: i32) -> (i32, i32, i32) {
    %c0_i32 = arith.constant 0 : i32
    %c0_i32_0 = arith.constant 0 : i32
    return %arg1, %arg0, %c0_i32 : i32, i32, i32
  }
  func.func @transform_1(%arg0: i32, %arg1: i32) -> (i32, i32) {
    %c0_i32 = arith.constant 0 : i32
    %c0_i32_0 = arith.constant 0 : i32
    %c0_i32_1 = arith.constant 0 : i32
    return %c0_i32, %c0_i32_0 : i32, i32
  }
  func.func @transform_2(%arg0: i32, %arg1: i32) -> (i32, i32) {
    %c0_i32 = arith.constant 0 : i32
    %c0_i32_0 = arith.constant 0 : i32
    %c0_i32_1 = arith.constant 0 : i32
    return %c0_i32, %c0_i32_0 : i32, i32
  }
  func.func @transform_3(%arg0: i32, %arg1: i32) -> (i32, i32) {
    %c0_i32 = arith.constant 0 : i32
    %c0_i32_0 = arith.constant 0 : i32
    %c0_i32_1 = arith.constant 0 : i32
    return %c0_i32, %c0_i32_0 : i32, i32
  }
  func.func @transform_4(%arg0: i32, %arg1: i32) -> (i32, i32) {
    %c0_i32 = arith.constant 0 : i32
    %c0_i32_0 = arith.constant 0 : i32
    return %arg0, %c0_i32 : i32, i32
  }
}

</mosaic_0001>

<llo_original>
// kernel: tpu_custom_call.1
$region0: #{tpu_custom_call.1}
  #allocation0 [shape = 'u32[]', space=smem, size = 0x4, offset = 0x4, fixed_abs, tag = 'smem constant byte address 0x4 - core index']
  #allocation1 [shape = 'u32[72,128]{1,0:T(1,128)}', space=vmem, size = 0x9000, scoped, tag = 'internal scratch']
  #allocation2 [shape = 'f32[8,128]{1,0:T(8,128)}', space=vmem, size = 0x1000, scoped, tag = 'scratch operand']
  #allocation3 [shape = 'f32[8,128]{1,0:T(8,128)}', space=vmem, size = 0x1000, scoped, tag = 'scratch operand']
  #allocation4 [shape = 'f32[1,1]{1,0:T(1,128)S(1)}', space=vmem, size = 0x200, scoped, tag = 'scoped memory for tpu_custom_call.1']
  %s0 = inlined_call_operand.hbm [shape: f32[8,8,512], index: 0, kind: input, shape index: {}]
  %s1 = inlined_call_operand.hbm [shape: f32[128,512], index: 1, kind: input, shape index: {}]
  %s2 = inlined_call_operand.vmem [shape: f32[1,128], index: 2, kind: input, shape index: {}]
  %s3 = inlined_call_operand.<no memory space> [shape: f32[1,1], index: 3, kind: input, shape index: {}]
  %s4 = inlined_call_operand.hbm [shape: f32[8,128], index: 4, kind: output, shape index: {}]
  %s5 = sld [smem:[#allocation0]]
  $region65: #{tpu_custom_call.1} parent=0
    _
  %s7 = ssub.s32 1, %s5
  %s8 = scalar_select 0, %s7, %s5
  %v9 = vstv %s3
  %10 = vst [vmem:[#allocation4] sm:$0x1] %v9
  $region1: #{tpu_custom_call.1} parent=0
    #allocation5 [shape = 'u8[131072]{0}', space=vmem, size = 0x20000, scoped, tag = 'input window, operand 0']
    #allocation6 [shape = 's32[2]{0}', space=sflag, size = 0x8, scoped, tag = 'scoped memory for tpu_custom_call.1']
    #allocation7 [shape = 's32[2]{0}', space=sflag, size = 0x8, scoped, tag = 'scoped memory for tpu_custom_call.1']
    #allocation8 [shape = 'u8[262144]{0}', space=vmem, size = 0x40000, scoped, tag = 'input window, operand 1, single buffered']
    #allocation9 [shape = 's32[1]{0}', space=sflag, size = 0x4, scoped, tag = 'scoped memory for tpu_custom_call.1']
    #allocation10 [shape = 'u8[4096]{0}', space=vmem, size = 0x1000, scoped, tag = 'output window, operand 0, single buffered']
    %11 = vsyncpa [#allocation6], 0
    %s12 = scalar_lea.sflag [#allocation6], 1
    %13 = vsyncpa %s12, 0
    %14 = vsyncpa [#allocation9], 0
    %15 = vsyncpa [#allocation7], 0
    loop: start=0, step=1, limit=4
    $region2: #{tpu_custom_call.1} parent=1 // loop_pre_header
      _
    $region3: #{tpu_custom_call.1} parent=1 // loop_header
      %s17 = sphi 0, %s21
      %p18 = scmp.ge.s32.totalorder %s17, 4
      %s24 = sphi 0, %s36
      %s25 = sphi 0, %s32
      %s26 = sphi 0, %s24
      %s27 = sphi 0, %s25
      %s28 = sphi 0, %s26
      %s29 = sphi 0, %s27
      %s41 = sphi 0, %s43
      %s44 = sphi 0, %s41
      %s45 = sphi 0, %s44
      %s61 = sphi 0, %s45
      %s65 = sphi 0, %s65
      %s67 = sphi 0, %s65
      %s68 = sphi 0, %s67
      %s82 = sphi 0, %s68
      %s86 = sphi 0, %s86
      %s88 = sphi 0, %s86
      %s89 = sphi 0, %s88
      %s103 = sphi 0, %s89
      %s107 = sphi 0, %s107
      %s109 = sphi 0, %s107
      %s110 = sphi 0, %s109
      %s124 = sphi 0, %s110
      %s130 = sphi 0, %s132
      %s133 = sphi 0, %s130
      %s134 = sphi 0, %s133
      %s150 = sphi 0, %s134
    $region4: #{tpu_custom_call.1} parent=1 // loop_header_branch
      %20 = sbr.rel (%p18) target = $region8
    $region5: #{tpu_custom_call.1} parent=1 // loop_body
      %s22 = ssub.s32 %s17, 1
      %s23 = ssub.s32 %s17, 2
      %s30 = sadd.s32 1, %s25
      %p31 = scmp.ge.s32.totalorder %s30, 2
      %s32 = scalar_select %p31, 0, %s30
      %s33 = sadd.s32 1, %s24
      %s34 = scalar_select %p31, %s33, %s24
      %p35 = scmp.ge.s32.totalorder %s34, 1
      %s36 = scalar_select %p35, 0, %s34
      %s37 = ssub.s32 %s25, %s32
      %s38 = ssub.s32 %s24, %s36
      %s39 = sor.u32 %s37, %s38
      %p40 = scmp.eq.s32.totalorder %s39, 0
      %s42 = sadd.s32 %s41, 1
      %s43 = scalar_select %p40, %s41, %s42
      %p46 = pneg %p40
      %p47 = scmp.eq.s32.totalorder %s17, 1
      %p48 = por %p46, %p47
      %p49 = scmp.ne.s32.totalorder %s41, %s44
      %p50 = scmp.eq.s32.totalorder %s17, 0
      %p51 = por %p49, %p50
      %p52 = scmp.ne.s32.totalorder %s41, %s44
      %p53 = scmp.eq.s32.totalorder %s22, 1
      %p54 = por %p52, %p53
      %p55 = scmp.ne.s32.totalorder %s44, %s45
      %p56 = scmp.eq.s32.totalorder %s22, 0
      %p57 = por %p55, %p56
      %p58 = scmp.ne.s32.totalorder %s44, %s45
      %p59 = scmp.eq.s32.totalorder %s23, 1
      %p60 = por %p58, %p59
      %p62 = scmp.ne.s32.totalorder %s45, %s61
      %p63 = scmp.eq.s32.totalorder %s23, 0
      %p64 = por %p62, %p63
      %s66 = sadd.s32 %s65, 1
      %p69 = scmp.eq.s32.totalorder %s17, 1
      %p70 = scmp.ne.s32.totalorder %s65, %s67
      %p71 = scmp.eq.s32.totalorder %s17, 0
      %p72 = por %p70, %p71
      %p73 = scmp.ne.s32.totalorder %s65, %s67
      %p74 = scmp.eq.s32.totalorder %s22, 1
      %p75 = por %p73, %p74
      %p76 = scmp.ne.s32.totalorder %s67, %s68
      %p77 = scmp.eq.s32.totalorder %s22, 0
      %p78 = por %p76, %p77
      %p79 = scmp.ne.s32.totalorder %s67, %s68
      %p80 = scmp.eq.s32.totalorder %s23, 1
      %p81 = por %p79, %p80
      %p83 = scmp.ne.s32.totalorder %s68, %s82
      %p84 = scmp.eq.s32.totalorder %s23, 0
      %p85 = por %p83, %p84
      %s87 = sadd.s32 %s86, 1
      %p90 = scmp.eq.s32.totalorder %s17, 1
      %p91 = scmp.ne.s32.totalorder %s86, %s88
      %p92 = scmp.eq.s32.totalorder %s17, 0
      %p93 = por %p91, %p92
      %p94 = scmp.ne.s32.totalorder %s86, %s88
      %p95 = scmp.eq.s32.totalorder %s22, 1
      %p96 = por %p94, %p95
      %p97 = scmp.ne.s32.totalorder %s88, %s89
      %p98 = scmp.eq.s32.totalorder %s22, 0
      %p99 = por %p97, %p98
      %p100 = scmp.ne.s32.totalorder %s88, %s89
      %p101 = scmp.eq.s32.totalorder %s23, 1
      %p102 = por %p100, %p101
      %p104 = scmp.ne.s32.totalorder %s89, %s103
      %p105 = scmp.eq.s32.totalorder %s23, 0
      %p106 = por %p104, %p105
      %s108 = sadd.s32 %s107, 1
      %p111 = scmp.eq.s32.totalorder %s17, 1
      %p112 = scmp.ne.s32.totalorder %s107, %s109
      %p113 = scmp.eq.s32.totalorder %s17, 0
      %p114 = por %p112, %p113
      %p115 = scmp.ne.s32.totalorder %s107, %s109
      %p116 = scmp.eq.s32.totalorder %s22, 1
      %p117 = por %p115, %p116
      %p118 = scmp.ne.s32.totalorder %s109, %s110
      %p119 = scmp.eq.s32.totalorder %s22, 0
      %p120 = por %p118, %p119
      %p121 = scmp.ne.s32.totalorder %s109, %s110
      %p122 = scmp.eq.s32.totalorder %s23, 1
      %p123 = por %p121, %p122
      %p125 = scmp.ne.s32.totalorder %s110, %s124
      %p126 = scmp.eq.s32.totalorder %s23, 0
      %p127 = por %p125, %p126
      %s128 = ssub.s32 %s24, %s36
      %p129 = scmp.eq.s32.totalorder %s128, 0
      %s131 = sadd.s32 %s130, 1
      %s132 = scalar_select %p129, %s130, %s131
      %p135 = pneg %p129
      %p136 = scmp.eq.s32.totalorder %s17, 1
      %p137 = por %p135, %p136
      %p138 = scmp.ne.s32.totalorder %s130, %s133
      %p139 = scmp.eq.s32.totalorder %s17, 0
      %p140 = por %p138, %p139
      %p141 = scmp.ne.s32.totalorder %s130, %s133
      %p142 = scmp.eq.s32.totalorder %s22, 1
      %p143 = por %p141, %p142
      %p144 = scmp.ne.s32.totalorder %s133, %s134
      %p145 = scmp.eq.s32.totalorder %s22, 0
      %p146 = por %p144, %p145
      %p147 = scmp.ne.s32.totalorder %s133, %s134
      %p148 = scmp.eq.s32.totalorder %s23, 1
      %p149 = por %p147, %p148
      %p151 = scmp.ne.s32.totalorder %s134, %s150
      %p152 = scmp.eq.s32.totalorder %s23, 0
      %p153 = por %p151, %p152
      %p154 = scmp.le.s32.totalorder 1, %s17
      %p155 = scmp.lt.s32.totalorder %s17, 3
      %p156 = pnand %p154, %p155
      %p157 = pneg %p156
      // Predicated region
      $region9: #{tpu_custom_call.1} parent=5 // pred_check
        _
      $region10: #{tpu_custom_call.1} parent=5 // pred_check_branch
        %159 = sbr.rel (%p156) target = $region12
      $region11: #{tpu_custom_call.1} parent=5 // pred_region
        %s160 = ssub.s32 %s17, 1
        // Predicated region
        $region13: #{tpu_custom_call.1} parent=11 // pred_check
          %p161 = pneg %p78
        $region14: #{tpu_custom_call.1} parent=11 // pred_check_branch
          %163 = sbr.rel (%p161) target = $region16
        $region15: #{tpu_custom_call.1} parent=11 // pred_region
          %165 = vsyncadd [#allocation9], 0
          %s166 = sshll.u32 %s1, 4
          %s167 = int_to_ptr.hbm [resolvable:$true] %s166
          %s168 = sshll.u32 [#allocation8], 4
          %s169 = int_to_ptr.vmem [resolvable:$true] %s168
          %174 = dma.hbm_to_vmem [thread:$0]  %s167, 8192, %s169, [#allocation9], 512, 512, 32
        $region16: #{tpu_custom_call.1} parent=11 // pred_fallthru
          _
        // Predicated region
        $region17: #{tpu_custom_call.1} parent=11 // pred_check
          %p175 = pneg %p99
        $region18: #{tpu_custom_call.1} parent=11 // pred_check_branch
          %177 = sbr.rel (%p175) target = $region20
        $region19: #{tpu_custom_call.1} parent=11 // pred_region
          _
        $region20: #{tpu_custom_call.1} parent=11 // pred_fallthru
          _
        // Predicated region
        $region21: #{tpu_custom_call.1} parent=11 // pred_check
          %p178 = pneg %p120
        $region22: #{tpu_custom_call.1} parent=11 // pred_check_branch
          %180 = sbr.rel (%p178) target = $region24
        $region23: #{tpu_custom_call.1} parent=11 // pred_region
          _
        $region24: #{tpu_custom_call.1} parent=11 // pred_fallthru
          _
      $region12: #{tpu_custom_call.1} parent=5 // pred_fallthru
        _
      %p181 = scmp.lt.s32.totalorder %s17, 2
      // Predicated region
      $region25: #{tpu_custom_call.1} parent=5 // pred_check
        %p182 = pneg %p181
      $region26: #{tpu_custom_call.1} parent=5 // pred_check_branch
        %184 = sbr.rel (%p182) target = $region28
      $region27: #{tpu_custom_call.1} parent=5 // pred_region
        // Predicated region
        $region29: #{tpu_custom_call.1} parent=27 // pred_check
          %p185 = pneg %p51
        $region30: #{tpu_custom_call.1} parent=27 // pred_check_branch
          %187 = sbr.rel (%p185) target = $region32
        $region31: #{tpu_custom_call.1} parent=27 // pred_region
          %s188 = sand.u32 %s41, 1
          %s189 = scalar_lea.sflag [#allocation6], %s188
          %s190 = sand.u32 %s41, 1
          %s191 = smul.addr %s190, 128
          %s192 = scalar_lea.vmem [#allocation5], %s191
          %s193 = smul.u32 4, %s25
          %195 = vsyncadd %s189, 0
          %s196 = smul.addr %s24, 4
          %s197 = smul.addr %s193, 4
          %s198 = sadd.s32 %s196, %s197
          %s199 = smul.addr %s198, 8
          %s200 = scalar_lea.hbm %s0, %s199
          %s201 = sshll.u32 %s200, 4
          %s202 = int_to_ptr.hbm [resolvable:$true] %s201
          %s203 = sshll.u32 %s192, 4
          %s204 = int_to_ptr.vmem [resolvable:$true] %s203
          %209 = dma.hbm_to_vmem [thread:$0]  %s202, 2048, %s204, %s189, 512, 512, 32
        $region32: #{tpu_custom_call.1} parent=27 // pred_fallthru
          _
      $region28: #{tpu_custom_call.1} parent=5 // pred_fallthru
        _
      %p210 = scmp.le.s32.totalorder 1, %s17
      %p211 = scmp.lt.s32.totalorder %s17, 3
      %p212 = pnand %p210, %p211
      %p213 = pneg %p212
      // Predicated region
      $region33: #{tpu_custom_call.1} parent=5 // pred_check
        _
      $region34: #{tpu_custom_call.1} parent=5 // pred_check_branch
        %215 = sbr.rel (%p212) target = $region36
      $region35: #{tpu_custom_call.1} parent=5 // pred_region
        %s216 = ssub.s32 %s17, 1
        %s217 = sand.u32 %s44, 1
        %s218 = scalar_lea.sflag [#allocation6], %s217
        %s219 = sand.u32 %s44, 1
        %s220 = smul.addr %s219, 128
        %s221 = scalar_lea.vmem [#allocation5], %s220
        // Predicated region
        $region37: #{tpu_custom_call.1} parent=35 // pred_check
          %p222 = pneg %p57
        $region38: #{tpu_custom_call.1} parent=35 // pred_check_branch
          %224 = sbr.rel (%p222) target = $region40
        $region39: #{tpu_custom_call.1} parent=35 // pred_region
          %226 = dma.done %s218, 2048
        $region40: #{tpu_custom_call.1} parent=35 // pred_fallthru
          _
        // Predicated region
        $region41: #{tpu_custom_call.1} parent=35 // pred_check
          %p227 = pneg %p78
        $region42: #{tpu_custom_call.1} parent=35 // pred_check_branch
          %229 = sbr.rel (%p227) target = $region44
        $region43: #{tpu_custom_call.1} parent=35 // pred_region
          %231 = dma.done [#allocation9], 8192
        $region44: #{tpu_custom_call.1} parent=35 // pred_fallthru
          _
        %s232 = sand.u32 %s44, 1
        %s233 = scalar_lea.sflag [#allocation6], %s232
        %s234 = sand.u32 %s44, 1
        %s235 = smul.addr %s234, 128
        %s236 = scalar_lea.vmem [#allocation5], %s235
        %p237 = pneg %p57
        %p238 = pneg %p54
        %p239 = pneg %p78
        %p240 = pneg %p75
        %p241 = pneg %p99
        %p242 = pneg %p96
        %p243 = pneg %p120
        %p244 = pneg %p117
        %p245 = pneg %p146
        %p246 = pneg %p143
        %s247 = smul.u32 4, %s27
        %p248 = scmp.eq.s32.totalorder %s27, 0
        // Predicated region
        $region45: #{tpu_custom_call.1} parent=35 // pred_check
          %p249 = pneg %p248
        $region46: #{tpu_custom_call.1} parent=35 // pred_check_branch
          %251 = sbr.rel (%p249) target = $region48
        $region47: #{tpu_custom_call.1} parent=35 // pred_region
          %252 = vst [vmem:[#allocation2] sm:$0xff] 0.0
          %253 = vst [vmem:[#allocation3] sm:$0xff] 0.0
        $region48: #{tpu_custom_call.1} parent=35 // pred_fallthru
          _
        %v254 = vld [vmem:[#allocation8] sm:$0xff]
        %v255 = vld [vmem:[#allocation8 + $0x8] sm:$0xff]
        %v256 = vld [vmem:[#allocation8 + $0x10] sm:$0xff]
        %v257 = vld [vmem:[#allocation8 + $0x18] sm:$0xff]
        %v258 = vld [vmem:[#allocation8 + $0x20] sm:$0xff]
        %v259 = vld [vmem:[#allocation8 + $0x28] sm:$0xff]
        %v260 = vld [vmem:[#allocation8 + $0x30] sm:$0xff]
        %v261 = vld [vmem:[#allocation8 + $0x38] sm:$0xff]
        %v262 = vld [vmem:[#allocation8 + $0x40] sm:$0xff]
        %v263 = vld [vmem:[#allocation8 + $0x48] sm:$0xff]
        %v264 = vld [vmem:[#allocation8 + $0x50] sm:$0xff]
        %v265 = vld [vmem:[#allocation8 + $0x58] sm:$0xff]
        %v266 = vld [vmem:[#allocation8 + $0x60] sm:$0xff]
        %v267 = vld [vmem:[#allocation8 + $0x68] sm:$0xff]
        %v268 = vld [vmem:[#allocation8 + $0x70] sm:$0xff]
        %v269 = vld [vmem:[#allocation8 + $0x78] sm:$0xff]
        %v270 = vld [vmem:[#allocation8 + $0x80] sm:$0xff]
        %v271 = vld [vmem:[#allocation8 + $0x88] sm:$0xff]
        %v272 = vld [vmem:[#allocation8 + $0x90] sm:$0xff]
        %v273 = vld [vmem:[#allocation8 + $0x98] sm:$0xff]
        %v274 = vld [vmem:[#allocation8 + $0xa0] sm:$0xff]
        %v275 = vld [vmem:[#allocation8 + $0xa8] sm:$0xff]
        %v276 = vld [vmem:[#allocation8 + $0xb0] sm:$0xff]
        %v277 = vld [vmem:[#allocation8 + $0xb8] sm:$0xff]
        %v278 = vld [vmem:[#allocation8 + $0xc0] sm:$0xff]
        %v279 = vld [vmem:[#allocation8 + $0xc8] sm:$0xff]
        %v280 = vld [vmem:[#allocation8 + $0xd0] sm:$0xff]
        %v281 = vld [vmem:[#allocation8 + $0xd8] sm:$0xff]
        %v282 = vld [vmem:[#allocation8 + $0xe0] sm:$0xff]
        %v283 = vld [vmem:[#allocation8 + $0xe8] sm:$0xff]
        %v284 = vld [vmem:[#allocation8 + $0xf0] sm:$0xff]
        %v285 = vld [vmem:[#allocation8 + $0xf8] sm:$0xff]
        %v286 = vld [vmem:[#allocation8 + $0x100] sm:$0xff]
        %v287 = vld [vmem:[#allocation8 + $0x108] sm:$0xff]
        %v288 = vld [vmem:[#allocation8 + $0x110] sm:$0xff]
        %v289 = vld [vmem:[#allocation8 + $0x118] sm:$0xff]
        %v290 = vld [vmem:[#allocation8 + $0x120] sm:$0xff]
        %v291 = vld [vmem:[#allocation8 + $0x128] sm:$0xff]
        %v292 = vld [vmem:[#allocation8 + $0x130] sm:$0xff]
        %v293 = vld [vmem:[#allocation8 + $0x138] sm:$0xff]
        %v294 = vld [vmem:[#allocation8 + $0x140] sm:$0xff]
        %v295 = vld [vmem:[#allocation8 + $0x148] sm:$0xff]
        %v296 = vld [vmem:[#allocation8 + $0x150] sm:$0xff]
        %v297 = vld [vmem:[#allocation8 + $0x158] sm:$0xff]
        %v298 = vld [vmem:[#allocation8 + $0x160] sm:$0xff]
        %v299 = vld [vmem:[#allocation8 + $0x168] sm:$0xff]
        %v300 = vld [vmem:[#allocation8 + $0x170] sm:$0xff]
        %v301 = vld [vmem:[#allocation8 + $0x178] sm:$0xff]
        %v302 = vld [vmem:[#allocation8 + $0x180] sm:$0xff]
        %v303 = vld [vmem:[#allocation8 + $0x188] sm:$0xff]
        %v304 = vld [vmem:[#allocation8 + $0x190] sm:$0xff]
        %v305 = vld [vmem:[#allocation8 + $0x198] sm:$0xff]
        %v306 = vld [vmem:[#allocation8 + $0x1a0] sm:$0xff]
        %v307 = vld [vmem:[#allocation8 + $0x1a8] sm:$0xff]
        %v308 = vld [vmem:[#allocation8 + $0x1b0] sm:$0xff]
        %v309 = vld [vmem:[#allocation8 + $0x1b8] sm:$0xff]
        %v310 = vld [vmem:[#allocation8 + $0x1c0] sm:$0xff]
        %v311 = vld [vmem:[#allocation8 + $0x1c8] sm:$0xff]
        %v312 = vld [vmem:[#allocation8 + $0x1d0] sm:$0xff]
        %v313 = vld [vmem:[#allocation8 + $0x1d8] sm:$0xff]
        %v314 = vld [vmem:[#allocation8 + $0x1e0] sm:$0xff]
        %v315 = vld [vmem:[#allocation8 + $0x1e8] sm:$0xff]
        %v316 = vld [vmem:[#allocation8 + $0x1f0] sm:$0xff]
        %v317 = vld [vmem:[#allocation8 + $0x1f8] sm:$0xff]
        %v318 = vld [vmem:[#allocation2] sm:$0xff]
        %v319 = vld [vmem:[#allocation3] sm:$0xff]
        %v320 = vld [vmem:[%s221] sm:$0xff]
        %v321 = vld [vmem:[%s221 + $0x8] sm:$0xff]
        %v322 = vld [vmem:[%s221 + $0x10] sm:$0xff]
        %v323 = vld [vmem:[%s221 + $0x18] sm:$0xff]
        %324 = vmatpush.msra.mxu0 %v314
        %325 = vmatpush.msra.mxu0 %v310
        %326 = vmatpush.msra.mxu0 %v306
        %327 = vmatpush.msra.mxu0 %v302
        %328 = vmatpush.msra.mxu0 %v298
        %329 = vmatpush.msra.mxu0 %v294
        %330 = vmatpush.msra.mxu0 %v290
        %331 = vmatpush.msra.mxu0 %v286
        %332 = vmatpush.msra.mxu0 %v282
        %333 = vmatpush.msra.mxu0 %v278
        %334 = vmatpush.msra.mxu0 %v274
        %335 = vmatpush.msra.mxu0 %v270
        %336 = vmatpush.msra.mxu0 %v266
        %337 = vmatpush.msra.mxu0 %v262
        %338 = vmatpush.msra.mxu0 %v258
        %339 = vmatpush.msra.mxu0 %v254
        %340 = vmatmul.f32.gmra.mxu0 %v318
        %v341 = vpop.f32.mrf.mxu0
        %v342 = vadd.f32 0.0, %v341
        %343 = vdwg.mxu0
        %344 = vmatpush.msra.mxu0 %v315
        %345 = vmatpush.msra.mxu0 %v311
        %346 = vmatpush.msra.mxu0 %v307
        %347 = vmatpush.msra.mxu0 %v303
        %348 = vmatpush.msra.mxu0 %v299
        %349 = vmatpush.msra.mxu0 %v295
        %350 = vmatpush.msra.mxu0 %v291
        %351 = vmatpush.msra.mxu0 %v287
        %352 = vmatpush.msra.mxu0 %v283
        %353 = vmatpush.msra.mxu0 %v279
        %354 = vmatpush.msra.mxu0 %v275
        %355 = vmatpush.msra.mxu0 %v271
        %356 = vmatpush.msra.mxu0 %v267
        %357 = vmatpush.msra.mxu0 %v263
        %358 = vmatpush.msra.mxu0 %v259
        %359 = vmatpush.msra.mxu0 %v255
        %360 = vmatmul.f32.gmra.mxu0 %v318
        %v361 = vpop.f32.mrf.mxu0
        %v362 = vadd.f32 0.0, %v361
        %363 = vdwg.mxu0
        %364 = vmatpush.msra.mxu0 %v316
        %365 = vmatpush.msra.mxu0 %v312
        %366 = vmatpush.msra.mxu0 %v308
        %367 = vmatpush.msra.mxu0 %v304
        %368 = vmatpush.msra.mxu0 %v300
        %369 = vmatpush.msra.mxu0 %v296
        %370 = vmatpush.msra.mxu0 %v292
        %371 = vmatpush.msra.mxu0 %v288
        %372 = vmatpush.msra.mxu0 %v284
        %373 = vmatpush.msra.mxu0 %v280
        %374 = vmatpush.msra.mxu0 %v276
        %375 = vmatpush.msra.mxu0 %v272
        %376 = vmatpush.msra.mxu0 %v268
        %377 = vmatpush.msra.mxu0 %v264
        %378 = vmatpush.msra.mxu0 %v260
        %379 = vmatpush.msra.mxu0 %v256
        %380 = vmatmul.f32.gmra.mxu0 %v318
        %v381 = vpop.f32.mrf.mxu0
        %v382 = vadd.f32 0.0, %v381
        %383 = vdwg.mxu0
        %384 = vmatpush.msra.mxu0 %v317
        %385 = vmatpush.msra.mxu0 %v313
        %386 = vmatpush.msra.mxu0 %v309
        %387 = vmatpush.msra.mxu0 %v305
        %388 = vmatpush.msra.mxu0 %v301
        %389 = vmatpush.msra.mxu0 %v297
        %390 = vmatpush.msra.mxu0 %v293
        %391 = vmatpush.msra.mxu0 %v289
        %392 = vmatpush.msra.mxu0 %v285
        %393 = vmatpush.msra.mxu0 %v281
        %394 = vmatpush.msra.mxu0 %v277
        %395 = vmatpush.msra.mxu0 %v273
        %396 = vmatpush.msra.mxu0 %v269
        %397 = vmatpush.msra.mxu0 %v265
        %398 = vmatpush.msra.mxu0 %v261
        %399 = vmatpush.msra.mxu0 %v257
        %400 = vmatmul.f32.gmra.mxu0 %v318
        %v401 = vpop.f32.mrf.mxu0
        %v402 = vadd.f32 0.0, %v401
        %403 = vdwg.mxu0
        %v404 = vadd.f32 %v320, %v342
        %v405 = vadd.f32 %v321, %v362
        %v406 = vadd.f32 %v322, %v382
        %v407 = vadd.f32 %v323, %v402
        %v408 = vmul.f32 %v404, 0.5
        %v409 = vtanh.pop %v408
        %v410 = vadd.f32 %v409, 1.0
        %v411 = vmul.f32 %v410, 0.5
        %v412 = vmul.f32 %v405, 0.5
        %v413 = vtanh.pop %v412
        %v414 = vadd.f32 %v413, 1.0
        %v415 = vmul.f32 %v414, 0.5
        %v416 = vtanh.pop %v406
        %v417 = vmul.f32 %v407, 0.5
        %v418 = vtanh.pop %v417
        %v419 = vadd.f32 %v418, 1.0
        %v420 = vmul.f32 %v419, 0.5
        %v421 = vmul.f32 %v415, %v319
        %v422 = vmul.f32 %v411, %v416
        %v423 = vadd.f32 %v421, %v422
        %v424 = vtanh.pop %v423
        %v425 = vmul.f32 %v420, %v424
        %s426 = smul.u32 %s27, 4
        %p427 = scmp.lt.s32.totalorder %s426, 8
        %s428 = scalar_select %p427, 1, 0
        %v429 = vstv %s428
        %vm430 = vcmp.eq.s32.totalorder %v429, 1
        %v431 = vsel %vm430, %v425, %v318
        %v432 = vsel %vm430, %v423, %v319
        %s433 = scalar_lea.vmem %s221, 32 [#allocation5]
        %v434 = vld [vmem:[%s433] sm:$0xff]
        %v435 = vld [vmem:[%s433 + $0x8] sm:$0xff]
        %v436 = vld [vmem:[%s433 + $0x10] sm:$0xff]
        %v437 = vld [vmem:[%s433 + $0x18] sm:$0xff]
        %438 = vmatpush.msra.mxu0 %v314
        %439 = vmatpush.msra.mxu0 %v310
        %440 = vmatpush.msra.mxu0 %v306
        %441 = vmatpush.msra.mxu0 %v302
        %442 = vmatpush.msra.mxu0 %v298
        %443 = vmatpush.msra.mxu0 %v294
        %444 = vmatpush.msra.mxu0 %v290
        %445 = vmatpush.msra.mxu0 %v286
        %446 = vmatpush.msra.mxu0 %v282
        %447 = vmatpush.msra.mxu0 %v278
        %448 = vmatpush.msra.mxu0 %v274
        %449 = vmatpush.msra.mxu0 %v270
        %450 = vmatpush.msra.mxu0 %v266
        %451 = vmatpush.msra.mxu0 %v262
        %452 = vmatpush.msra.mxu0 %v258
        %453 = vmatpush.msra.mxu0 %v254
        %454 = vmatmul.f32.gmra.mxu0 %v431
        %v455 = vpop.f32.mrf.mxu0
        %v456 = vadd.f32 0.0, %v455
        %457 = vdwg.mxu0
        %458 = vmatpush.msra.mxu0 %v315
        %459 = vmatpush.msra.mxu0 %v311
        %460 = vmatpush.msra.mxu0 %v307
        %461 = vmatpush.msra.mxu0 %v303
        %462 = vmatpush.msra.mxu0 %v299
        %463 = vmatpush.msra.mxu0 %v295
        %464 = vmatpush.msra.mxu0 %v291
        %465 = vmatpush.msra.mxu0 %v287
        %466 = vmatpush.msra.mxu0 %v283
        %467 = vmatpush.msra.mxu0 %v279
        %468 = vmatpush.msra.mxu0 %v275
        %469 = vmatpush.msra.mxu0 %v271
        %470 = vmatpush.msra.mxu0 %v267
        %471 = vmatpush.msra.mxu0 %v263
        %472 = vmatpush.msra.mxu0 %v259
        %473 = vmatpush.msra.mxu0 %v255
        %474 = vmatmul.f32.gmra.mxu0 %v431
        %v475 = vpop.f32.mrf.mxu0
        %v476 = vadd.f32 0.0, %v475
        %477 = vdwg.mxu0
        %478 = vmatpush.msra.mxu0 %v316
        %479 = vmatpush.msra.mxu0 %v312
        %480 = vmatpush.msra.mxu0 %v308
        %481 = vmatpush.msra.mxu0 %v304
        %482 = vmatpush.msra.mxu0 %v300
        %483 = vmatpush.msra.mxu0 %v296
        %484 = vmatpush.msra.mxu0 %v292
        %485 = vmatpush.msra.mxu0 %v288
        %486 = vmatpush.msra.mxu0 %v284
        %487 = vmatpush.msra.mxu0 %v280
        %488 = vmatpush.msra.mxu0 %v276
        %489 = vmatpush.msra.mxu0 %v272
        %490 = vmatpush.msra.mxu0 %v268
        %491 = vmatpush.msra.mxu0 %v264
        %492 = vmatpush.msra.mxu0 %v260
        %493 = vmatpush.msra.mxu0 %v256
        %494 = vmatmul.f32.gmra.mxu0 %v431
        %v495 = vpop.f32.mrf.mxu0
        %v496 = vadd.f32 0.0, %v495
        %497 = vdwg.mxu0
        %498 = vmatpush.msra.mxu0 %v317
        %499 = vmatpush.msra.mxu0 %v313
        %500 = vmatpush.msra.mxu0 %v309
        %501 = vmatpush.msra.mxu0 %v305
        %502 = vmatpush.msra.mxu0 %v301
        %503 = vmatpush.msra.mxu0 %v297
        %504 = vmatpush.msra.mxu0 %v293
        %505 = vmatpush.msra.mxu0 %v289
        %506 = vmatpush.msra.mxu0 %v285
        %507 = vmatpush.msra.mxu0 %v281
        %508 = vmatpush.msra.mxu0 %v277
        %509 = vmatpush.msra.mxu0 %v273
        %510 = vmatpush.msra.mxu0 %v269
        %511 = vmatpush.msra.mxu0 %v265
        %512 = vmatpush.msra.mxu0 %v261
        %513 = vmatpush.msra.mxu0 %v257
        %514 = vmatmul.f32.gmra.mxu0 %v431
        %v515 = vpop.f32.mrf.mxu0
        %v516 = vadd.f32 0.0, %v515
        %517 = vdwg.mxu0
        %v518 = vadd.f32 %v434, %v456
        %v519 = vadd.f32 %v435, %v476
        %v520 = vadd.f32 %v436, %v496
        %v521 = vadd.f32 %v437, %v516
        %v522 = vmul.f32 %v518, 0.5
        %v523 = vtanh.pop %v522
        %v524 = vadd.f32 %v523, 1.0
        %v525 = vmul.f32 %v524, 0.5
        %v526 = vmul.f32 %v519, 0.5
        %v527 = vtanh.pop %v526
        %v528 = vadd.f32 %v527, 1.0
        %v529 = vmul.f32 %v528, 0.5
        %v530 = vtanh.pop %v520
        %v531 = vmul.f32 %v521, 0.5
        %v532 = vtanh.pop %v531
        %v533 = vadd.f32 %v532, 1.0
        %v534 = vmul.f32 %v533, 0.5
        %v535 = vmul.f32 %v529, %v432
        %v536 = vmul.f32 %v525, %v530
        %v537 = vadd.f32 %v535, %v536
        %v538 = vtanh.pop %v537
        %v539 = vmul.f32 %v534, %v538
        %s540 = sadd.s32 %s426, 1
        %p541 = scmp.lt.s32.totalorder %s540, 8
        %s542 = scalar_select %p541, 1, 0
        %v543 = vstv %s542
        %vm544 = vcmp.eq.s32.totalorder %v543, 1
        %v545 = vsel %vm544, %v539, %v431
        %v546 = vsel %vm544, %v537, %v432
        %s547 = scalar_lea.vmem %s221, 64 [#allocation5]
        %v548 = vld [vmem:[%s547] sm:$0xff]
        %v549 = vld [vmem:[%s547 + $0x8] sm:$0xff]
        %v550 = vld [vmem:[%s547 + $0x10] sm:$0xff]
        %v551 = vld [vmem:[%s547 + $0x18] sm:$0xff]
        %552 = vmatpush.msra.mxu0 %v314
        %553 = vmatpush.msra.mxu0 %v310
        %554 = vmatpush.msra.mxu0 %v306
        %555 = vmatpush.msra.mxu0 %v302
        %556 = vmatpush.msra.mxu0 %v298
        %557 = vmatpush.msra.mxu0 %v294
        %558 = vmatpush.msra.mxu0 %v290
        %559 = vmatpush.msra.mxu0 %v286
        %560 = vmatpush.msra.mxu0 %v282
        %561 = vmatpush.msra.mxu0 %v278
        %562 = vmatpush.msra.mxu0 %v274
        %563 = vmatpush.msra.mxu0 %v270
        %564 = vmatpush.msra.mxu0 %v266
        %565 = vmatpush.msra.mxu0 %v262
        %566 = vmatpush.msra.mxu0 %v258
        %567 = vmatpush.msra.mxu0 %v254
        %568 = vmatmul.f32.gmra.mxu0 %v545
        %v569 = vpop.f32.mrf.mxu0
        %v570 = vadd.f32 0.0, %v569
        %571 = vdwg.mxu0
        %572 = vmatpush.msra.mxu0 %v315
        %573 = vmatpush.msra.mxu0 %v311
        %574 = vmatpush.msra.mxu0 %v307
        %575 = vmatpush.msra.mxu0 %v303
        %576 = vmatpush.msra.mxu0 %v299
        %577 = vmatpush.msra.mxu0 %v295
        %578 = vmatpush.msra.mxu0 %v291
        %579 = vmatpush.msra.mxu0 %v287
        %580 = vmatpush.msra.mxu0 %v283
        %581 = vmatpush.msra.mxu0 %v279
        %582 = vmatpush.msra.mxu0 %v275
        %583 = vmatpush.msra.mxu0 %v271
        %584 = vmatpush.msra.mxu0 %v267
        %585 = vmatpush.msra.mxu0 %v263
        %586 = vmatpush.msra.mxu0 %v259
        %587 = vmatpush.msra.mxu0 %v255
        %588 = vmatmul.f32.gmra.mxu0 %v545
        %v589 = vpop.f32.mrf.mxu0
        %v590 = vadd.f32 0.0, %v589
        %591 = vdwg.mxu0
        %592 = vmatpush.msra.mxu0 %v316
        %593 = vmatpush.msra.mxu0 %v312
        %594 = vmatpush.msra.mxu0 %v308
        %595 = vmatpush.msra.mxu0 %v304
        %596 = vmatpush.msra.mxu0 %v300
        %597 = vmatpush.msra.mxu0 %v296
        %598 = vmatpush.msra.mxu0 %v292
        %599 = vmatpush.msra.mxu0 %v288
        %600 = vmatpush.msra.mxu0 %v284
        %601 = vmatpush.msra.mxu0 %v280
        %602 = vmatpush.msra.mxu0 %v276
        %603 = vmatpush.msra.mxu0 %v272
        %604 = vmatpush.msra.mxu0 %v268
        %605 = vmatpush.msra.mxu0 %v264
        %606 = vmatpush.msra.mxu0 %v260
        %607 = vmatpush.msra.mxu0 %v256
        %608 = vmatmul.f32.gmra.mxu0 %v545
        %v609 = vpop.f32.mrf.mxu0
        %v610 = vadd.f32 0.0, %v609
        %611 = vdwg.mxu0
        %612 = vmatpush.msra.mxu0 %v317
        %613 = vmatpush.msra.mxu0 %v313
        %614 = vmatpush.msra.mxu0 %v309
        %615 = vmatpush.msra.mxu0 %v305
        %616 = vmatpush.msra.mxu0 %v301
        %617 = vmatpush.msra.mxu0 %v297
        %618 = vmatpush.msra.mxu0 %v293
        %619 = vmatpush.msra.mxu0 %v289
        %620 = vmatpush.msra.mxu0 %v285
        %621 = vmatpush.msra.mxu0 %v281
        %622 = vmatpush.msra.mxu0 %v277
        %623 = vmatpush.msra.mxu0 %v273
        %624 = vmatpush.msra.mxu0 %v269
        %625 = vmatpush.msra.mxu0 %v265
        %626 = vmatpush.msra.mxu0 %v261
        %627 = vmatpush.msra.mxu0 %v257
        %628 = vmatmul.f32.gmra.mxu0 %v545
        %v629 = vpop.f32.mrf.mxu0
        %v630 = vadd.f32 0.0, %v629
        %631 = vdwg.mxu0
        %v632 = vadd.f32 %v548, %v570
        %v633 = vadd.f32 %v549, %v590
        %v634 = vadd.f32 %v550, %v610
        %v635 = vadd.f32 %v551, %v630
        %v636 = vmul.f32 %v632, 0.5
        %v637 = vtanh.pop %v636
        %v638 = vadd.f32 %v637, 1.0
        %v639 = vmul.f32 %v638, 0.5
        %v640 = vmul.f32 %v633, 0.5
        %v641 = vtanh.pop %v640
        %v642 = vadd.f32 %v641, 1.0
        %v643 = vmul.f32 %v642, 0.5
        %v644 = vtanh.pop %v634
        %v645 = vmul.f32 %v635, 0.5
        %v646 = vtanh.pop %v645
        %v647 = vadd.f32 %v646, 1.0
        %v648 = vmul.f32 %v647, 0.5
        %v649 = vmul.f32 %v643, %v546
        %v650 = vmul.f32 %v639, %v644
        %v651 = vadd.f32 %v649, %v650
        %v652 = vtanh.pop %v651
        %v653 = vmul.f32 %v648, %v652
        %s654 = sadd.s32 %s426, 2
        %p655 = scmp.lt.s32.totalorder %s654, 8
        %s656 = scalar_select %p655, 1, 0
        %v657 = vstv %s656
        %vm658 = vcmp.eq.s32.totalorder %v657, 1
        %v659 = vsel %vm658, %v653, %v545
        %v660 = vsel %vm658, %v651, %v546
        %s661 = scalar_lea.vmem %s221, 96 [#allocation5]
        %v662 = vld [vmem:[%s661] sm:$0xff]
        %v663 = vld [vmem:[%s661 + $0x8] sm:$0xff]
        %v664 = vld [vmem:[%s661 + $0x10] sm:$0xff]
        %v665 = vld [vmem:[%s661 + $0x18] sm:$0xff]
        %666 = vmatpush.msra.mxu0 %v314
        %667 = vmatpush.msra.mxu0 %v310
        %668 = vmatpush.msra.mxu0 %v306
        %669 = vmatpush.msra.mxu0 %v302
        %670 = vmatpush.msra.mxu0 %v298
        %671 = vmatpush.msra.mxu0 %v294
        %672 = vmatpush.msra.mxu0 %v290
        %673 = vmatpush.msra.mxu0 %v286
        %674 = vmatpush.msra.mxu0 %v282
        %675 = vmatpush.msra.mxu0 %v278
        %676 = vmatpush.msra.mxu0 %v274
        %677 = vmatpush.msra.mxu0 %v270
        %678 = vmatpush.msra.mxu0 %v266
        %679 = vmatpush.msra.mxu0 %v262
        %680 = vmatpush.msra.mxu0 %v258
        %681 = vmatpush.msra.mxu0 %v254
        %682 = vmatmul.f32.gmra.mxu0 %v659
        %v683 = vpop.f32.mrf.mxu0
        %v684 = vadd.f32 0.0, %v683
        %685 = vdwg.mxu0
        %686 = vmatpush.msra.mxu0 %v315
        %687 = vmatpush.msra.mxu0 %v311
        %688 = vmatpush.msra.mxu0 %v307
        %689 = vmatpush.msra.mxu0 %v303
        %690 = vmatpush.msra.mxu0 %v299
        %691 = vmatpush.msra.mxu0 %v295
        %692 = vmatpush.msra.mxu0 %v291
        %693 = vmatpush.msra.mxu0 %v287
        %694 = vmatpush.msra.mxu0 %v283
        %695 = vmatpush.msra.mxu0 %v279
        %696 = vmatpush.msra.mxu0 %v275
        %697 = vmatpush.msra.mxu0 %v271
        %698 = vmatpush.msra.mxu0 %v267
        %699 = vmatpush.msra.mxu0 %v263
        %700 = vmatpush.msra.mxu0 %v259
        %701 = vmatpush.msra.mxu0 %v255
        %702 = vmatmul.f32.gmra.mxu0 %v659
        %v703 = vpop.f32.mrf.mxu0
        %v704 = vadd.f32 0.0, %v703
        %705 = vdwg.mxu0
        %706 = vmatpush.msra.mxu0 %v316
        %707 = vmatpush.msra.mxu0 %v312
        %708 = vmatpush.msra.mxu0 %v308
        %709 = vmatpush.msra.mxu0 %v304
        %710 = vmatpush.msra.mxu0 %v300
        %711 = vmatpush.msra.mxu0 %v296
        %712 = vmatpush.msra.mxu0 %v292
        %713 = vmatpush.msra.mxu0 %v288
        %714 = vmatpush.msra.mxu0 %v284
        %715 = vmatpush.msra.mxu0 %v280
        %716 = vmatpush.msra.mxu0 %v276
        %717 = vmatpush.msra.mxu0 %v272
        %718 = vmatpush.msra.mxu0 %v268
        %719 = vmatpush.msra.mxu0 %v264
        %720 = vmatpush.msra.mxu0 %v260
        %721 = vmatpush.msra.mxu0 %v256
        %722 = vmatmul.f32.gmra.mxu0 %v659
        %v723 = vpop.f32.mrf.mxu0
        %v724 = vadd.f32 0.0, %v723
        %725 = vdwg.mxu0
        %726 = vmatpush.msra.mxu0 %v317
        %727 = vmatpush.msra.mxu0 %v313
        %728 = vmatpush.msra.mxu0 %v309
        %729 = vmatpush.msra.mxu0 %v305
        %730 = vmatpush.msra.mxu0 %v301
        %731 = vmatpush.msra.mxu0 %v297
        %732 = vmatpush.msra.mxu0 %v293
        %733 = vmatpush.msra.mxu0 %v289
        %734 = vmatpush.msra.mxu0 %v285
        %735 = vmatpush.msra.mxu0 %v281
        %736 = vmatpush.msra.mxu0 %v277
        %737 = vmatpush.msra.mxu0 %v273
        %738 = vmatpush.msra.mxu0 %v269
        %739 = vmatpush.msra.mxu0 %v265
        %740 = vmatpush.msra.mxu0 %v261
        %741 = vmatpush.msra.mxu0 %v257
        %742 = vmatmul.f32.gmra.mxu0 %v659
        %v743 = vpop.f32.mrf.mxu0
        %v744 = vadd.f32 0.0, %v743
        %745 = vdwg.mxu0
        %v746 = vadd.f32 %v662, %v684
        %v747 = vadd.f32 %v663, %v704
        %v748 = vadd.f32 %v664, %v724
        %v749 = vadd.f32 %v665, %v744
        %v750 = vmul.f32 %v746, 0.5
        %v751 = vtanh.pop %v750
        %v752 = vadd.f32 %v751, 1.0
        %v753 = vmul.f32 %v752, 0.5
        %v754 = vmul.f32 %v747, 0.5
        %v755 = vtanh.pop %v754
        %v756 = vadd.f32 %v755, 1.0
        %v757 = vmul.f32 %v756, 0.5
        %v758 = vtanh.pop %v748
        %v759 = vmul.f32 %v749, 0.5
        %v760 = vtanh.pop %v759
        %v761 = vadd.f32 %v760, 1.0
        %v762 = vmul.f32 %v761, 0.5
        %v763 = vmul.f32 %v757, %v660
        %v764 = vmul.f32 %v753, %v758
        %v765 = vadd.f32 %v763, %v764
        %v766 = vtanh.pop %v765
        %v767 = vmul.f32 %v762, %v766
        %s768 = sadd.s32 %s426, 3
        %p769 = scmp.lt.s32.totalorder %s768, 8
        %s770 = scalar_select %p769, 1, 0
        %v771 = vstv %s770
        %vm772 = vcmp.eq.s32.totalorder %v771, 1
        %v773 = vsel %vm772, %v767, %v659
        %v774 = vsel %vm772, %v765, %v660
        %775 = vst [vmem:[#allocation2] sm:$0xff] %v773
        %776 = vst [vmem:[#allocation3] sm:$0xff] %v774
        %p777 = scmp.eq.s32.totalorder %s27, 1
        // Predicated region
        $region49: #{tpu_custom_call.1} parent=35 // pred_check
          %p778 = pneg %p777
        $region50: #{tpu_custom_call.1} parent=35 // pred_check_branch
          %780 = sbr.rel (%p778) target = $region52
        $region51: #{tpu_custom_call.1} parent=35 // pred_region
          %v781 = vld [vmem:[%s2] sm:$0x1]
          %v783 = vperm.slane %v781, 0
          %v785 = vmul.f32 %v773, %v783
          %786 = vadd.xlane.f32.xlu0 %v785
          %v787 = vpop.xlane.xlu0 %786
          %v788 = vld [vmem:[#allocation4] sm:$0x1]
          %v790 = vperm.slane %v788, 0
          %v792 = vadd.f32 %v787, %v790
          %794 = vset.pattern.permute.xlu0 0
          %795 = vperm.xlu0 %794, %v792
          %v796 = vpop.permute.xlu0 %795
          %798 = vst [vmem:[#allocation10] sm:$0xff] %v796
        $region52: #{tpu_custom_call.1} parent=35 // pred_fallthru
          _
        // Predicated region
        $region53: #{tpu_custom_call.1} parent=35 // pred_check
          %p799 = pneg %p143
        $region54: #{tpu_custom_call.1} parent=35 // pred_check_branch
          %801 = sbr.rel (%p799) target = $region56
        $region55: #{tpu_custom_call.1} parent=35 // pred_region
          %803 = vsyncadd [#allocation7], 0
          %s804 = smul.addr %s26, 8
          %s805 = scalar_lea.hbm %s4, %s804
          %s807 = sshll.u32 [#allocation10], 4
          %s808 = int_to_ptr.vmem [resolvable:$true] %s807
          %s809 = sshll.u32 %s805, 4
          %s810 = int_to_ptr.hbm [resolvable:$true] %s809
          %812 = dma.vmem_to_hbm [thread:$0]  %s808, 128, %s810, [#allocation7]
        $region56: #{tpu_custom_call.1} parent=35 // pred_fallthru
          _
        // Predicated region
        $region57: #{tpu_custom_call.1} parent=35 // pred_check
          %p813 = pneg %p143
        $region58: #{tpu_custom_call.1} parent=35 // pred_check_branch
          %815 = sbr.rel (%p813) target = $region60
        $region59: #{tpu_custom_call.1} parent=35 // pred_region
          %817 = dma.done [#allocation7], 128
        $region60: #{tpu_custom_call.1} parent=35 // pred_fallthru
          _
      $region36: #{tpu_custom_call.1} parent=5 // pred_fallthru
        _
      %p818 = scmp.le.s32.totalorder 2, %s17
      // Predicated region
      $region61: #{tpu_custom_call.1} parent=5 // pred_check
        %p819 = pneg %p818
      $region62: #{tpu_custom_call.1} parent=5 // pred_check_branch
        %821 = sbr.rel (%p819) target = $region64
      $region63: #{tpu_custom_call.1} parent=5 // pred_region
        %s822 = ssub.s32 %s17, 2
      $region64: #{tpu_custom_call.1} parent=5 // pred_fallthru
        _
    $region6: #{tpu_custom_call.1} parent=1 // loop_footer
      %s21 = sadd.s32 1, %s17
    $region7: #{tpu_custom_call.1} parent=1 // loop_footer_branch
      %16 = sbr.rel target = $region3
    $region8: #{tpu_custom_call.1} parent=1 // loop_exit
      _
    %823 = vsyncpa [#allocation6], 1
    %s824 = scalar_lea.sflag [#allocation6], 1
    %825 = vsyncpa %s824, 1
    %826 = vsyncpa [#allocation9], 1
    %827 = vsyncpa [#allocation7], 1
    %s828 = scalar_lea.sflag [#allocation7], 1
    %829 = vsyncpa %s828, 1

</llo_original>
